<compile_context>
chip_gen: v7x
topology: tpu7x:2x2x1
jax: 0.10.0
libtpu: 0.0.40
codegen_flags: <defaults>
</compile_context>

<pallas_src>
import functools

import jax
import jax.numpy as jnp
from jax import lax
from jax.experimental import pallas as pl
from jax.experimental.pallas import tpu as pltpu


def _vpu_adapter_kernel(w_ref, b_ref, x_ref, o_ref, *, c_in, c_out):
    """Pointwise conv + sigmoid on the VPU (small channel counts).

    w_ref: (C_out, C_in)        SMEM (cheap scalar reads)
    b_ref: (C_out,)             SMEM
    x_ref: (C_in, TILE_R, 128)  VMEM
    o_ref: (C_out, TILE_R, 128) VMEM
    """
    x = x_ref[...].astype(jnp.float32)                 # (C_in, TILE_R, 128)
    for o in range(c_out):
        acc = x[0] * w_ref[o, 0]
        for c in range(1, c_in):
            acc = acc + x[c] * w_ref[o, c]             # scalar * dense slab MAC
        acc = acc + b_ref[o]
        # sigmoid(z) = 1 / (1 + exp(-z)); exp and rcp both land on the EUP slot.
        sig = pl.reciprocal(1.0 + jnp.exp(-acc), approx=True)
        o_ref[o] = sig.astype(o_ref.dtype)             # one dense store / channel


def _mxu_adapter_kernel(w_ref, b_ref, x_ref, o_ref):
    """MXU path, only used when channel dims are large enough to feed the MXU.

    w_ref: (C_out, C_in)        VMEM
    b_ref: (C_out, 1, 128)      VMEM (lane-dense pre-broadcast bias)
    x_ref: (C_in, TILE_R, 128)  VMEM
    o_ref: (C_out, TILE_R, 128) VMEM
    """
    y = lax.dot_general(
        w_ref[...], x_ref[...],
        dimension_numbers=(((1,), (0,)), ((), ())),
        preferred_element_type=jnp.float32,
        precision=lax.Precision.HIGHEST)               # no silent bf16 pass
    y = y + b_ref[...].astype(jnp.float32)             # sublane broadcast over TILE_R
    o_ref[...] = pl.reciprocal(1.0 + jnp.exp(-y), approx=True).astype(o_ref.dtype)


def _vmem_capacity_bytes():
    try:
        return int(pltpu.get_tpu_info().vmem_capacity_bytes)
    except Exception:
        return 64 * 1024 * 1024                        # conservative (v7x per-TC)


@functools.partial(jax.jit, static_argnames=("tile_r_cap",))
def deeplabv3_v1_forward(x_nchw, weight, bias, *, tile_r_cap=2048):
    """Pallas implementation of DeepLabv3_v1.forward.

    x_nchw : [N, C_in, H, W]
    weight : [C_out, C_in]   (PyTorch Conv2d 1x1 weight squeezed)
    bias   : [C_out]
    returns: [N, C_out, H, W]
    """
    n, c_in, h, w = x_nchw.shape
    c_out = weight.shape[0]
    s = h * w
    itemsize = x_nchw.dtype.itemsize

    # --- sublane+lane dense spatial layout: [N, C_in, R, 128] ---------------
    r_total = pl.cdiv(s, 128)
    s_pad = r_total * 128
    x_flat = x_nchw.reshape(n, c_in, s)                 # pure reshape, no transpose
    if s_pad != s:
        # Zero-pad so the trailing axis factors into (R, 128); pad pixels are
        # sliced away afterwards (sigmoid of zeros is finite -> no NaN/Inf).
        x_flat = jnp.pad(x_flat, ((0, 0), (0, 0), (0, s_pad - s)))
    x_grid = x_flat.reshape(n, c_in, r_total, 128)

    # --- generation-aware tile-row selection ---------------------------------
    vmem_cap = _vmem_capacity_bytes()
    if vmem_cap >= 96 * 1024 * 1024:                    # v5e / v6e: 128 MiB VMEM
        vmem_budget = 40 * 1024 * 1024
        vmem_limit = 64 * 1024 * 1024
    else:                                               # v7x: 64 MiB VMEM per TC
        vmem_budget = 14 * 1024 * 1024
        vmem_limit = 30 * 1024 * 1024
    bytes_per_row = (c_in + c_out) * 128 * itemsize * 2  # x2 for double buffering
    max_tile_r = max(8, (vmem_budget // bytes_per_row) // 8 * 8)
    tile_r = min(tile_r_cap, max_tile_r)

    # v7x has 2 TensorCores sharing HBM: make sure the 'parallel' grid has at
    # least two steps when the whole image would otherwise fit in one tile.
    if n * pl.cdiv(r_total, tile_r) < 2 and r_total > 8:
        tile_r = min(tile_r, ((r_total + 1) // 2 + 7) // 8 * 8)

    if tile_r >= r_total:
        tile_r = r_total                                # full-extent block allowed
    grid = (n, pl.cdiv(r_total, tile_r))

    # --- kernel / operand selection ------------------------------------------
    use_mxu = (c_in * c_out) > 1024                     # tiny adapters stay on VPU

    if use_mxu:
        kernel = _mxu_adapter_kernel
        w_arg = weight
        b_arg = jnp.broadcast_to(
            bias.reshape(c_out, 1, 1).astype(jnp.float32), (c_out, 1, 128))
        w_spec = pl.BlockSpec((c_out, c_in), lambda ni, si: (0, 0))
        b_spec = pl.BlockSpec((c_out, 1, 128), lambda ni, si: (0, 0, 0))
    else:
        kernel = functools.partial(_vpu_adapter_kernel, c_in=c_in, c_out=c_out)
        w_arg = weight
        b_arg = bias
        w_spec = pl.BlockSpec(memory_space=pltpu.MemorySpace.SMEM)
        b_spec = pl.BlockSpec(memory_space=pltpu.MemorySpace.SMEM)

    cost = pl.CostEstimate(
        flops=int(2 * n * s * c_in * c_out),
        transcendentals=int(n * s * c_out),
        bytes_accessed=int(n * s_pad * (c_in + c_out) * itemsize
                           + (c_out * c_in + c_out) * 4),
    )

    out_grid = pl.pallas_call(
        kernel,
        out_shape=jax.ShapeDtypeStruct((n, c_out, r_total, 128), x_nchw.dtype),
        grid_spec=pltpu.PrefetchScalarGridSpec(
            num_scalar_prefetch=0,
            grid=grid,
            in_specs=[
                w_spec,
                b_spec,
                pl.BlockSpec((None, c_in, tile_r, 128),
                             lambda ni, si: (ni, 0, si, 0)),
            ],
            out_specs=pl.BlockSpec((None, c_out, tile_r, 128),
                                   lambda ni, si: (ni, 0, si, 0)),
        ),
        compiler_params=pltpu.CompilerParams(
            dimension_semantics=("parallel", "parallel"),
            vmem_limit_bytes=vmem_limit),
        cost_estimate=cost,
    )(w_arg, b_arg, x_grid)

    out_flat = out_grid.reshape(n, c_out, s_pad)
    if s_pad != s:
        out_flat = out_flat[:, :, :s]
    return out_flat.reshape(n, c_out, h, w)


def _init_params(in_channels, out_channels, key):
    """Deterministic Conv2d(1x1)-style init (kaiming-uniform-ish bounds)."""
    kw, kb = jax.random.split(key)
    bound = 1.0 / (float(in_channels) ** 0.5)           # fan_in of a 1x1 kernel
    weight = jax.random.uniform(
        kw, (out_channels, in_channels), jnp.float32, -bound, bound)
    bias = jax.random.uniform(
        kb, (out_channels,), jnp.float32, -bound, bound)
    return weight, bias


if __name__ == "__main__":
    in_channels, out_channels = 4, 3
    batch, spatial = 2, 16

    key = jax.random.PRNGKey(0)
    k_x, k_p = jax.random.split(key)

    x = jax.random.normal(
        k_x, (batch, in_channels, spatial, spatial), jnp.float32)
    weight, bias = _init_params(in_channels, out_channels, k_p)

    out = deeplabv3_v1_forward(x, weight, bias)
    out = jax.block_until_ready(out)

    # Reference in plain JAX: 1x1 conv == per-pixel channel matmul + sigmoid.
    ref = jax.nn.sigmoid(
        jnp.einsum("nchw,oc->nohw", x, weight) + bias[None, :, None, None])
    assert out.shape == (batch, out_channels, spatial, spatial)
    # approx=True EUP reciprocal is slightly reduced precision; sigmoid outputs
    # live in (0, 1), so a 2e-3 tolerance is far below anything semantically
    # meaningful for this module.
    assert jnp.allclose(out, ref, atol=2e-3, rtol=2e-3), float(
        jnp.max(jnp.abs(out - ref)))

    print("KERNEL_OK")
</pallas_src>

<mosaic_0001>
module attributes {stable_mosaic.version = 11 : i64} {
  func.func @_vpu_adapter_kernel(%arg0: i32, %arg1: i32, %arg2: memref<3x4xf32, #tpu.memory_space<smem>>, %arg3: memref<3xf32, #tpu.memory_space<smem>>, %arg4: memref<1x4x2x128xf32, #tpu.memory_space<vmem>>, %arg5: memref<1x3x2x128xf32, #tpu.memory_space<vmem>>) attributes {dimension_semantics = [#tpu.dimension_semantics<parallel>, #tpu.dimension_semantics<parallel>], iteration_bounds = array<i64: 2, 1>, scalar_prefetch = 0 : i64, scratch_operands = 0 : i64, tpu.core_type = #tpu.core_type<tc>, window_params = [{transform_indices = @transform_0, window_bounds = array<i64: 3, 4>}, {transform_indices = @transform_1, window_bounds = array<i64: 3>}, {transform_indices = @transform_2, window_bounds = array<i64: 1, 4, 2, 128>}, {transform_indices = @transform_3, window_bounds = array<i64: 1, 3, 2, 128>}]} {
    %c0 = arith.constant 0 : index
    %c0_0 = arith.constant 0 : index
    %c0_1 = arith.constant 0 : index
    %c0_2 = arith.constant 0 : index
    %0 = vector.load %arg4[%c0, %c0_0, %c0_1, %c0_2] : memref<1x4x2x128xf32, #tpu.memory_space<vmem>>, vector<1x4x2x128xf32>
    %1 = vector.shape_cast %0 : vector<1x4x2x128xf32> to vector<4x2x128xf32>
    %2 = vector.extract_strided_slice %1 {offsets = [0, 0, 0], sizes = [1, 2, 128], strides = [1, 1, 1]} : vector<4x2x128xf32> to vector<1x2x128xf32>
    %3 = vector.shape_cast %2 : vector<1x2x128xf32> to vector<2x128xf32>
    %c0_3 = arith.constant 0 : index
    %c0_4 = arith.constant 0 : index
    %4 = memref.load %arg2[%c0_3, %c0_4] : memref<3x4xf32, #tpu.memory_space<smem>>
    %5 = vector.broadcast %4 : f32 to vector<2x128xf32>
    %6 = arith.mulf %3, %5 : vector<2x128xf32>
    %7 = vector.extract_strided_slice %1 {offsets = [1, 0, 0], sizes = [1, 2, 128], strides = [1, 1, 1]} : vector<4x2x128xf32> to vector<1x2x128xf32>
    %8 = vector.shape_cast %7 : vector<1x2x128xf32> to vector<2x128xf32>
    %c0_5 = arith.constant 0 : index
    %c1 = arith.constant 1 : index
    %9 = memref.load %arg2[%c0_5, %c1] : memref<3x4xf32, #tpu.memory_space<smem>>
    %10 = vector.broadcast %9 : f32 to vector<2x128xf32>
    %11 = arith.mulf %8, %10 : vector<2x128xf32>
    %12 = arith.addf %6, %11 : vector<2x128xf32>
    %13 = vector.extract_strided_slice %1 {offsets = [2, 0, 0], sizes = [1, 2, 128], strides = [1, 1, 1]} : vector<4x2x128xf32> to vector<1x2x128xf32>
    %14 = vector.shape_cast %13 : vector<1x2x128xf32> to vector<2x128xf32>
    %c0_6 = arith.constant 0 : index
    %c2 = arith.constant 2 : index
    %15 = memref.load %arg2[%c0_6, %c2] : memref<3x4xf32, #tpu.memory_space<smem>>
    %16 = vector.broadcast %15 : f32 to vector<2x128xf32>
    %17 = arith.mulf %14, %16 : vector<2x128xf32>
    %18 = arith.addf %12, %17 : vector<2x128xf32>
    %19 = vector.extract_strided_slice %1 {offsets = [3, 0, 0], sizes = [1, 2, 128], strides = [1, 1, 1]} : vector<4x2x128xf32> to vector<1x2x128xf32>
    %20 = vector.shape_cast %19 : vector<1x2x128xf32> to vector<2x128xf32>
    %c0_7 = arith.constant 0 : index
    %c3 = arith.constant 3 : index
    %21 = memref.load %arg2[%c0_7, %c3] : memref<3x4xf32, #tpu.memory_space<smem>>
    %22 = vector.broadcast %21 : f32 to vector<2x128xf32>
    %23 = arith.mulf %20, %22 : vector<2x128xf32>
    %24 = arith.addf %18, %23 : vector<2x128xf32>
    %c0_8 = arith.constant 0 : index
    %25 = memref.load %arg3[%c0_8] : memref<3xf32, #tpu.memory_space<smem>>
    %26 = vector.broadcast %25 : f32 to vector<2x128xf32>
    %27 = arith.addf %24, %26 : vector<2x128xf32>
    %cst = arith.constant 0.000000e+00 : f32
    %28 = vector.broadcast %cst : f32 to vector<2x128xf32>
    %29 = arith.subf %28, %27 : vector<2x128xf32>
    %30 = math.exp %29 : vector<2x128xf32>
    %cst_9 = arith.constant 1.000000e+00 : f32
    %31 = vector.broadcast %cst_9 : f32 to vector<2x128xf32>
    %32 = arith.addf %31, %30 : vector<2x128xf32>
    %33 = tpu.reciprocal %32 {approx = true} : vector<2x128xf32> -> vector<2x128xf32>
    %c0_10 = arith.constant 0 : index
    %c0_11 = arith.constant 0 : index
    %c0_12 = arith.constant 0 : index
    %c0_13 = arith.constant 0 : index
    %34 = vector.load %arg5[%c0_10, %c0_11, %c0_12, %c0_13] : memref<1x3x2x128xf32, #tpu.memory_space<vmem>>, vector<1x1x2x128xf32>
    %35 = vector.shape_cast %34 : vector<1x1x2x128xf32> to vector<2x128xf32>
    %36 = vector.shape_cast %33 : vector<2x128xf32> to vector<1x1x2x128xf32>
    tpu.vector_store %arg5[%c0_10, %c0_11, %c0_12, %c0_13], %36 {strides = array<i32>} : memref<1x3x2x128xf32, #tpu.memory_space<vmem>>, vector<1x1x2x128xf32>,
    %37 = vector.extract_strided_slice %1 {offsets = [0, 0, 0], sizes = [1, 2, 128], strides = [1, 1, 1]} : vector<4x2x128xf32> to vector<1x2x128xf32>
    %38 = vector.shape_cast %37 : vector<1x2x128xf32> to vector<2x128xf32>
    %c1_14 = arith.constant 1 : index
    %c0_15 = arith.constant 0 : index
    %39 = memref.load %arg2[%c1_14, %c0_15] : memref<3x4xf32, #tpu.memory_space<smem>>
    %40 = vector.broadcast %39 : f32 to vector<2x128xf32>
    %41 = arith.mulf %38, %40 : vector<2x128xf32>
    %42 = vector.extract_strided_slice %1 {offsets = [1, 0, 0], sizes = [1, 2, 128], strides = [1, 1, 1]} : vector<4x2x128xf32> to vector<1x2x128xf32>
    %43 = vector.shape_cast %42 : vector<1x2x128xf32> to vector<2x128xf32>
    %c1_16 = arith.constant 1 : index
    %c1_17 = arith.constant 1 : index
    %44 = memref.load %arg2[%c1_16, %c1_17] : memref<3x4xf32, #tpu.memory_space<smem>>
    %45 = vector.broadcast %44 : f32 to vector<2x128xf32>
    %46 = arith.mulf %43, %45 : vector<2x128xf32>
    %47 = arith.addf %41, %46 : vector<2x128xf32>
    %48 = vector.extract_strided_slice %1 {offsets = [2, 0, 0], sizes = [1, 2, 128], strides = [1, 1, 1]} : vector<4x2x128xf32> to vector<1x2x128xf32>
    %49 = vector.shape_cast %48 : vector<1x2x128xf32> to vector<2x128xf32>
    %c1_18 = arith.constant 1 : index
    %c2_19 = arith.constant 2 : index
    %50 = memref.load %arg2[%c1_18, %c2_19] : memref<3x4xf32, #tpu.memory_space<smem>>
    %51 = vector.broadcast %50 : f32 to vector<2x128xf32>
    %52 = arith.mulf %49, %51 : vector<2x128xf32>
    %53 = arith.addf %47, %52 : vector<2x128xf32>
    %54 = vector.extract_strided_slice %1 {offsets = [3, 0, 0], sizes = [1, 2, 128], strides = [1, 1, 1]} : vector<4x2x128xf32> to vector<1x2x128xf32>
    %55 = vector.shape_cast %54 : vector<1x2x128xf32> to vector<2x128xf32>
    %c1_20 = arith.constant 1 : index
    %c3_21 = arith.constant 3 : index
    %56 = memref.load %arg2[%c1_20, %c3_21] : memref<3x4xf32, #tpu.memory_space<smem>>
    %57 = vector.broadcast %56 : f32 to vector<2x128xf32>
    %58 = arith.mulf %55, %57 : vector<2x128xf32>
    %59 = arith.addf %53, %58 : vector<2x128xf32>
    %c1_22 = arith.constant 1 : index
    %60 = memref.load %arg3[%c1_22] : memref<3xf32, #tpu.memory_space<smem>>
    %61 = vector.broadcast %60 : f32 to vector<2x128xf32>
    %62 = arith.addf %59, %61 : vector<2x128xf32>
    %cst_23 = arith.constant 0.000000e+00 : f32
    %63 = vector.broadcast %cst_23 : f32 to vector<2x128xf32>
    %64 = arith.subf %63, %62 : vector<2x128xf32>
    %65 = math.exp %64 : vector<2x128xf32>
    %cst_24 = arith.constant 1.000000e+00 : f32
    %66 = vector.broadcast %cst_24 : f32 to vector<2x128xf32>
    %67 = arith.addf %66, %65 : vector<2x128xf32>
    %68 = tpu.reciprocal %67 {approx = true} : vector<2x128xf32> -> vector<2x128xf32>
    %c0_25 = arith.constant 0 : index
    %c1_26 = arith.constant 1 : index
    %c0_27 = arith.constant 0 : index
    %c0_28 = arith.constant 0 : index
    %69 = vector.load %arg5[%c0_25, %c1_26, %c0_27, %c0_28] : memref<1x3x2x128xf32, #tpu.memory_space<vmem>>, vector<1x1x2x128xf32>
    %70 = vector.shape_cast %69 : vector<1x1x2x128xf32> to vector<2x128xf32>
    %71 = vector.shape_cast %68 : vector<2x128xf32> to vector<1x1x2x128xf32>
    tpu.vector_store %arg5[%c0_25, %c1_26, %c0_27, %c0_28], %71 {strides = array<i32>} : memref<1x3x2x128xf32, #tpu.memory_space<vmem>>, vector<1x1x2x128xf32>,
    %72 = vector.extract_strided_slice %1 {offsets = [0, 0, 0], sizes = [1, 2, 128], strides = [1, 1, 1]} : vector<4x2x128xf32> to vector<1x2x128xf32>
    %73 = vector.shape_cast %72 : vector<1x2x128xf32> to vector<2x128xf32>
    %c2_29 = arith.constant 2 : index
    %c0_30 = arith.constant 0 : index
    %74 = memref.load %arg2[%c2_29, %c0_30] : memref<3x4xf32, #tpu.memory_space<smem>>
    %75 = vector.broadcast %74 : f32 to vector<2x128xf32>
    %76 = arith.mulf %73, %75 : vector<2x128xf32>
    %77 = vector.extract_strided_slice %1 {offsets = [1, 0, 0], sizes = [1, 2, 128], strides = [1, 1, 1]} : vector<4x2x128xf32> to vector<1x2x128xf32>
    %78 = vector.shape_cast %77 : vector<1x2x128xf32> to vector<2x128xf32>
    %c2_31 = arith.constant 2 : index
    %c1_32 = arith.constant 1 : index
    %79 = memref.load %arg2[%c2_31, %c1_32] : memref<3x4xf32, #tpu.memory_space<smem>>
    %80 = vector.broadcast %79 : f32 to vector<2x128xf32>
    %81 = arith.mulf %78, %80 : vector<2x128xf32>
    %82 = arith.addf %76, %81 : vector<2x128xf32>
    %83 = vector.extract_strided_slice %1 {offsets = [2, 0, 0], sizes = [1, 2, 128], strides = [1, 1, 1]} : vector<4x2x128xf32> to vector<1x2x128xf32>
    %84 = vector.shape_cast %83 : vector<1x2x128xf32> to vector<2x128xf32>
    %c2_33 = arith.constant 2 : index
    %c2_34 = arith.constant 2 : index
    %85 = memref.load %arg2[%c2_33, %c2_34] : memref<3x4xf32, #tpu.memory_space<smem>>
    %86 = vector.broadcast %85 : f32 to vector<2x128xf32>
    %87 = arith.mulf %84, %86 : vector<2x128xf32>
    %88 = arith.addf %82, %87 : vector<2x128xf32>
    %89 = vector.extract_strided_slice %1 {offsets = [3, 0, 0], sizes = [1, 2, 128], strides = [1, 1, 1]} : vector<4x2x128xf32> to vector<1x2x128xf32>
    %90 = vector.shape_cast %89 : vector<1x2x128xf32> to vector<2x128xf32>
    %c2_35 = arith.constant 2 : index
    %c3_36 = arith.constant 3 : index
    %91 = memref.load %arg2[%c2_35, %c3_36] : memref<3x4xf32, #tpu.memory_space<smem>>
    %92 = vector.broadcast %91 : f32 to vector<2x128xf32>
    %93 = arith.mulf %90, %92 : vector<2x128xf32>
    %94 = arith.addf %88, %93 : vector<2x128xf32>
    %c2_37 = arith.constant 2 : index
    %95 = memref.load %arg3[%c2_37] : memref<3xf32, #tpu.memory_space<smem>>
    %96 = vector.broadcast %95 : f32 to vector<2x128xf32>
    %97 = arith.addf %94, %96 : vector<2x128xf32>
    %cst_38 = arith.constant 0.000000e+00 : f32
    %98 = vector.broadcast %cst_38 : f32 to vector<2x128xf32>
    %99 = arith.subf %98, %97 : vector<2x128xf32>
    %100 = math.exp %99 : vector<2x128xf32>
    %cst_39 = arith.constant 1.000000e+00 : f32
    %101 = vector.broadcast %cst_39 : f32 to vector<2x128xf32>
    %102 = arith.addf %101, %100 : vector<2x128xf32>
    %103 = tpu.reciprocal %102 {approx = true} : vector<2x128xf32> -> vector<2x128xf32>
    %c0_40 = arith.constant 0 : index
    %c2_41 = arith.constant 2 : index
    %c0_42 = arith.constant 0 : index
    %c0_43 = arith.constant 0 : index
    %104 = vector.load %arg5[%c0_40, %c2_41, %c0_42, %c0_43] : memref<1x3x2x128xf32, #tpu.memory_space<vmem>>, vector<1x1x2x128xf32>
    %105 = vector.shape_cast %104 : vector<1x1x2x128xf32> to vector<2x128xf32>
    %106 = vector.shape_cast %103 : vector<2x128xf32> to vector<1x1x2x128xf32>
    tpu.vector_store %arg5[%c0_40, %c2_41, %c0_42, %c0_43], %106 {strides = array<i32>} : memref<1x3x2x128xf32, #tpu.memory_space<vmem>>, vector<1x1x2x128xf32>,
    return
  }
  func.func @transform_0(%arg0: i32, %arg1: i32) -> (i32, i32) {
    %c0_i32 = arith.constant 0 : i32
    %c0_i32_0 = arith.constant 0 : i32
    %c0_i32_1 = arith.constant 0 : i32
    return %c0_i32, %c0_i32_0 : i32, i32
  }
  func.func @transform_1(%arg0: i32, %arg1: i32) -> i32 {
    %c0_i32 = arith.constant 0 : i32
    %c0_i32_0 = arith.constant 0 : i32
    return %c0_i32 : i32
  }
  func.func @transform_2(%arg0: i32, %arg1: i32) -> (i32, i32, i32, i32) {
    %c0_i32 = arith.constant 0 : i32
    %c0_i32_0 = arith.constant 0 : i32
    %c0_i32_1 = arith.constant 0 : i32
    return %arg0, %c0_i32, %arg1, %c0_i32_0 : i32, i32, i32, i32
  }
  func.func @transform_3(%arg0: i32, %arg1: i32) -> (i32, i32, i32, i32) {
    %c0_i32 = arith.constant 0 : i32
    %c0_i32_0 = arith.constant 0 : i32
    %c0_i32_1 = arith.constant 0 : i32
    return %arg0, %c0_i32, %arg1, %c0_i32_0 : i32, i32, i32, i32
  }
}

</mosaic_0001>

<llo_original>
// kernel: deeplabv3_v1_forward.1
$region0: #{deeplabv3_v1_forward.1}
  #allocation0 [shape = 'u32[]', space=smem, size = 0x4, offset = 0x4, fixed_abs, tag = 'smem constant byte address 0x4 - core index']
  #allocation1 [shape = 'u32[144,128]{1,0:T(1,128)}', space=vmem, size = 0x12000, scoped, tag = 'internal scratch']
  %s0 = inlined_call_operand.vmem [shape: f32[3,4], index: 0, kind: input, shape index: {}]
  %s1 = inlined_call_operand.vmem [shape: f32[3], index: 1, kind: input, shape index: {}]
  %s2 = inlined_call_operand.vmem [shape: f32[2,4,2,128], index: 2, kind: input, shape index: {}]
  %s3 = inlined_call_operand.vmem [shape: f32[2,3,2,128], index: 3, kind: output, shape index: {}]
  %s4 = sld [smem:[#allocation0]]
  $region53: #{deeplabv3_v1_forward.1} parent=0
    _
  %s6 = ssub.s32 1, %s4
  %s7 = scalar_select 0, %s6, %s4
  $region1: #{deeplabv3_v1_forward.1} parent=0
    #allocation2 [shape = 'u8[2048]{0}', space=smem, size = 0x800, scoped, tag = 'input window, operand 0, single buffered']
    #allocation3 [shape = 's32[2]{0}', space=sflag, size = 0x8, scoped, tag = 'scoped memory for deeplabv3_v1_forward.1']
    #allocation4 [shape = 'u8[512]{0}', space=smem, size = 0x200, scoped, tag = 'input window, operand 1, single buffered']
    #allocation5 [shape = 's32[1]{0}', space=sflag, size = 0x4, scoped, tag = 'scoped memory for deeplabv3_v1_forward.1']
    %8 = vsyncpa [#allocation3], 0
    %9 = vsyncpa [#allocation5], 0
    loop: start=0, step=1, limit=4
    $region2: #{deeplabv3_v1_forward.1} parent=1 // loop_pre_header
      _
    $region3: #{deeplabv3_v1_forward.1} parent=1 // loop_header
      %s11 = sphi 0, %s15
      %p12 = scmp.ge.s32.totalorder %s11, 4
      %s18 = sphi 0, %s30
      %s19 = sphi 0, %s26
      %s20 = sphi 0, %s18
      %s21 = sphi 0, %s19
      %s22 = sphi 0, %s20
      %s23 = sphi 0, %s21
      %s31 = sphi 0, %s31
      %s33 = sphi 0, %s31
      %s34 = sphi 0, %s33
      %s48 = sphi 0, %s34
      %s52 = sphi 0, %s52
      %s54 = sphi 0, %s52
      %s55 = sphi 0, %s54
      %s69 = sphi 0, %s55
      %s77 = sphi 0, %s79
      %s80 = sphi 0, %s77
      %s81 = sphi 0, %s80
      %s97 = sphi 0, %s81
      %s105 = sphi 0, %s107
      %s108 = sphi 0, %s105
      %s109 = sphi 0, %s108
      %s125 = sphi 0, %s109
    $region4: #{deeplabv3_v1_forward.1} parent=1 // loop_header_branch
      %14 = sbr.rel (%p12) target = $region8
    $region5: #{deeplabv3_v1_forward.1} parent=1 // loop_body
      %s16 = ssub.s32 %s11, 1
      %s17 = ssub.s32 %s11, 2
      %s24 = sadd.s32 1, %s19
      %p25 = scmp.ge.s32.totalorder %s24, 1
      %s26 = scalar_select %p25, 0, %s24
      %s27 = sadd.s32 1, %s18
      %s28 = scalar_select %p25, %s27, %s18
      %p29 = scmp.ge.s32.totalorder %s28, 2
      %s30 = scalar_select %p29, 0, %s28
      %s32 = sadd.s32 %s31, 1
      %p35 = scmp.eq.s32.totalorder %s11, 1
      %p36 = scmp.ne.s32.totalorder %s31, %s33
      %p37 = scmp.eq.s32.totalorder %s11, 0
      %p38 = por %p36, %p37
      %p39 = scmp.ne.s32.totalorder %s31, %s33
      %p40 = scmp.eq.s32.totalorder %s16, 1
      %p41 = por %p39, %p40
      %p42 = scmp.ne.s32.totalorder %s33, %s34
      %p43 = scmp.eq.s32.totalorder %s16, 0
      %p44 = por %p42, %p43
      %p45 = scmp.ne.s32.totalorder %s33, %s34
      %p46 = scmp.eq.s32.totalorder %s17, 1
      %p47 = por %p45, %p46
      %p49 = scmp.ne.s32.totalorder %s34, %s48
      %p50 = scmp.eq.s32.totalorder %s17, 0
      %p51 = por %p49, %p50
      %s53 = sadd.s32 %s52, 1
      %p56 = scmp.eq.s32.totalorder %s11, 1
      %p57 = scmp.ne.s32.totalorder %s52, %s54
      %p58 = scmp.eq.s32.totalorder %s11, 0
      %p59 = por %p57, %p58
      %p60 = scmp.ne.s32.totalorder %s52, %s54
      %p61 = scmp.eq.s32.totalorder %s16, 1
      %p62 = por %p60, %p61
      %p63 = scmp.ne.s32.totalorder %s54, %s55
      %p64 = scmp.eq.s32.totalorder %s16, 0
      %p65 = por %p63, %p64
      %p66 = scmp.ne.s32.totalorder %s54, %s55
      %p67 = scmp.eq.s32.totalorder %s17, 1
      %p68 = por %p66, %p67
      %p70 = scmp.ne.s32.totalorder %s55, %s69
      %p71 = scmp.eq.s32.totalorder %s17, 0
      %p72 = por %p70, %p71
      %s73 = ssub.s32 %s18, %s30
      %s74 = ssub.s32 %s19, %s26
      %s75 = sor.u32 %s73, %s74
      %p76 = scmp.eq.s32.totalorder %s75, 0
      %s78 = sadd.s32 %s77, 1
      %s79 = scalar_select %p76, %s77, %s78
      %p82 = pneg %p76
      %p83 = scmp.eq.s32.totalorder %s11, 1
      %p84 = por %p82, %p83
      %p85 = scmp.ne.s32.totalorder %s77, %s80
      %p86 = scmp.eq.s32.totalorder %s11, 0
      %p87 = por %p85, %p86
      %p88 = scmp.ne.s32.totalorder %s77, %s80
      %p89 = scmp.eq.s32.totalorder %s16, 1
      %p90 = por %p88, %p89
      %p91 = scmp.ne.s32.totalorder %s80, %s81
      %p92 = scmp.eq.s32.totalorder %s16, 0
      %p93 = por %p91, %p92
      %p94 = scmp.ne.s32.totalorder %s80, %s81
      %p95 = scmp.eq.s32.totalorder %s17, 1
      %p96 = por %p94, %p95
      %p98 = scmp.ne.s32.totalorder %s81, %s97
      %p99 = scmp.eq.s32.totalorder %s17, 0
      %p100 = por %p98, %p99
      %s101 = ssub.s32 %s18, %s30
      %s102 = ssub.s32 %s19, %s26
      %s103 = sor.u32 %s101, %s102
      %p104 = scmp.eq.s32.totalorder %s103, 0
      %s106 = sadd.s32 %s105, 1
      %s107 = scalar_select %p104, %s105, %s106
      %p110 = pneg %p104
      %p111 = scmp.eq.s32.totalorder %s11, 1
      %p112 = por %p110, %p111
      %p113 = scmp.ne.s32.totalorder %s105, %s108
      %p114 = scmp.eq.s32.totalorder %s11, 0
      %p115 = por %p113, %p114
      %p116 = scmp.ne.s32.totalorder %s105, %s108
      %p117 = scmp.eq.s32.totalorder %s16, 1
      %p118 = por %p116, %p117
      %p119 = scmp.ne.s32.totalorder %s108, %s109
      %p120 = scmp.eq.s32.totalorder %s16, 0
      %p121 = por %p119, %p120
      %p122 = scmp.ne.s32.totalorder %s108, %s109
      %p123 = scmp.eq.s32.totalorder %s17, 1
      %p124 = por %p122, %p123
      %p126 = scmp.ne.s32.totalorder %s109, %s125
      %p127 = scmp.eq.s32.totalorder %s17, 0
      %p128 = por %p126, %p127
      %p129 = scmp.le.s32.totalorder 1, %s11
      %p130 = scmp.lt.s32.totalorder %s11, 3
      %p131 = pnand %p129, %p130
      %p132 = pneg %p131
      // Predicated region
      $region9: #{deeplabv3_v1_forward.1} parent=5 // pred_check
        _
      $region10: #{deeplabv3_v1_forward.1} parent=5 // pred_check_branch
        %134 = sbr.rel (%p131) target = $region12
      $region11: #{deeplabv3_v1_forward.1} parent=5 // pred_region
        %s135 = ssub.s32 %s11, 1
        // Predicated region
        $region13: #{deeplabv3_v1_forward.1} parent=11 // pred_check
          %p136 = pneg %p44
        $region14: #{deeplabv3_v1_forward.1} parent=11 // pred_check_branch
          %138 = sbr.rel (%p136) target = $region16
        $region15: #{deeplabv3_v1_forward.1} parent=11 // pred_region
          %s140 = ssub.s32 64, 64
          %141 = vsyncadd [#allocation3], %s140
          %s143 = sshll.u32 %s0, 4
          %s144 = int_to_ptr.vmem [resolvable:$true] %s143
          %146 = dma.vmem_to_smem %s144, 64, [#allocation2], [#allocation3]
        $region16: #{deeplabv3_v1_forward.1} parent=11 // pred_fallthru
          _
        // Predicated region
        $region17: #{deeplabv3_v1_forward.1} parent=11 // pred_check
          %p147 = pneg %p65
        $region18: #{deeplabv3_v1_forward.1} parent=11 // pred_check_branch
          %149 = sbr.rel (%p147) target = $region20
        $region19: #{deeplabv3_v1_forward.1} parent=11 // pred_region
          %s151 = ssub.s32 16, 16
          %152 = vsyncadd [#allocation5], %s151
          %s154 = sshll.u32 %s1, 4
          %s155 = int_to_ptr.vmem [resolvable:$true] %s154
          %157 = dma.vmem_to_smem %s155, 16, [#allocation4], [#allocation5]
        $region20: #{deeplabv3_v1_forward.1} parent=11 // pred_fallthru
          _
      $region12: #{deeplabv3_v1_forward.1} parent=5 // pred_fallthru
        _
      %p158 = scmp.lt.s32.totalorder %s11, 2
      // Predicated region
      $region21: #{deeplabv3_v1_forward.1} parent=5 // pred_check
        %p159 = pneg %p158
      $region22: #{deeplabv3_v1_forward.1} parent=5 // pred_check_branch
        %161 = sbr.rel (%p159) target = $region24
      $region23: #{deeplabv3_v1_forward.1} parent=5 // pred_region
        // Predicated region
        $region25: #{deeplabv3_v1_forward.1} parent=23 // pred_check
          %p162 = pneg %p87
        $region26: #{deeplabv3_v1_forward.1} parent=23 // pred_check_branch
          %164 = sbr.rel (%p162) target = $region28
        $region27: #{deeplabv3_v1_forward.1} parent=23 // pred_region
          %p165 = scmp.lt.s32.totalorder %s18, 1
          %s166 = scalar_select %p165, %s18, 1
          %p167 = scmp.lt.s32.totalorder %s19, 0
          %s168 = scalar_select %p167, %s19, 0
          %s169 = smul.addr %s166, 4
          %s170 = sadd.s32 %s168, %s169
          %s171 = smul.addr %s170, 2
          %s172 = scalar_lea.vmem %s2, %s171
        $region28: #{deeplabv3_v1_forward.1} parent=23 // pred_fallthru
          _
      $region24: #{deeplabv3_v1_forward.1} parent=5 // pred_fallthru
        _
      %p173 = scmp.le.s32.totalorder 1, %s11
      %p174 = scmp.lt.s32.totalorder %s11, 3
      %p175 = pnand %p173, %p174
      %p176 = pneg %p175
      // Predicated region
      $region29: #{deeplabv3_v1_forward.1} parent=5 // pred_check
        _
      $region30: #{deeplabv3_v1_forward.1} parent=5 // pred_check_branch
        %178 = sbr.rel (%p175) target = $region32
      $region31: #{deeplabv3_v1_forward.1} parent=5 // pred_region
        %s179 = ssub.s32 %s11, 1
        // Predicated region
        $region33: #{deeplabv3_v1_forward.1} parent=31 // pred_check
          %p180 = pneg %p44
        $region34: #{deeplabv3_v1_forward.1} parent=31 // pred_check_branch
          %182 = sbr.rel (%p180) target = $region36
        $region35: #{deeplabv3_v1_forward.1} parent=31 // pred_region
          %183 = dma.done [#allocation3], 64
        $region36: #{deeplabv3_v1_forward.1} parent=31 // pred_fallthru
          _
        // Predicated region
        $region37: #{deeplabv3_v1_forward.1} parent=31 // pred_check
          %p184 = pneg %p65
        $region38: #{deeplabv3_v1_forward.1} parent=31 // pred_check_branch
          %186 = sbr.rel (%p184) target = $region40
        $region39: #{deeplabv3_v1_forward.1} parent=31 // pred_region
          %187 = dma.done [#allocation5], 16
        $region40: #{deeplabv3_v1_forward.1} parent=31 // pred_fallthru
          _
        %188 = sfence
        %p189 = pneg %p44
        %p190 = pneg %p41
        %p191 = pneg %p65
        %p192 = pneg %p62
        %p193 = scmp.lt.s32.totalorder %s20, 1
        %s194 = scalar_select %p193, %s20, 1
        %p195 = scmp.lt.s32.totalorder %s21, 0
        %s196 = scalar_select %p195, %s21, 0
        %s197 = smul.addr %s194, 4
        %s198 = sadd.s32 %s196, %s197
        %s199 = smul.addr %s198, 2
        %s200 = scalar_lea.vmem %s2, %s199
        %p201 = pneg %p93
        %p202 = pneg %p90
        %p203 = pneg %p121
        %p204 = pneg %p118
        %p205 = scmp.lt.s32.totalorder %s20, 1
        %s206 = scalar_select %p205, %s20, 1
        %p207 = scmp.lt.s32.totalorder %s21, 0
        %s208 = scalar_select %p207, %s21, 0
        %s209 = smul.addr %s206, 3
        %s210 = sadd.s32 %s208, %s209
        %s211 = smul.addr %s210, 2
        %s212 = scalar_lea.vmem %s3, %s211
        %p213 = scmp.lt.s32.totalorder %s20, 1
        %s214 = scalar_select %p213, %s20, 1
        %p215 = scmp.lt.s32.totalorder %s21, 0
        %s216 = scalar_select %p215, %s21, 0
        %s217 = smul.addr %s214, 4
        %s218 = sadd.s32 %s216, %s217
        %s219 = smul.addr %s218, 2
        %s220 = scalar_lea.vmem %s2, %s219
        %p221 = scmp.lt.s32.totalorder %s20, 1
        %s222 = scalar_select %p221, %s20, 1
        %p223 = scmp.lt.s32.totalorder %s21, 0
        %s224 = scalar_select %p223, %s21, 0
        %s225 = smul.addr %s222, 3
        %s226 = sadd.s32 %s224, %s225
        %s227 = smul.addr %s226, 2
        %s228 = scalar_lea.vmem %s3, %s227
        %v229 = vld [vmem:[%s220] sm:$0x3]
        %v230 = vld [vmem:[%s220 + $0x2] sm:$0x3]
        %v231 = vld [vmem:[%s220 + $0x4] sm:$0x3]
        %v232 = vld [vmem:[%s220 + $0x6] sm:$0x3]
        %s233 = sld [smem:[#allocation2]]
        %v234 = vstv %s233
        %v235 = vmul.f32 %v229, %v234
        %s236 = sld [smem:[#allocation2 + $0x1]]
        %v237 = vstv %s236
        %v238 = vmul.f32 %v230, %v237
        %v239 = vadd.f32 %v235, %v238
        %s240 = sld [smem:[#allocation2 + $0x2]]
        %v241 = vstv %s240
        %v242 = vmul.f32 %v231, %v241
        %v243 = vadd.f32 %v239, %v242
        %s244 = sld [smem:[#allocation2 + $0x3]]
        %v245 = vstv %s244
        %v246 = vmul.f32 %v232, %v245
        %v247 = vadd.f32 %v243, %v246
        %s248 = sld [smem:[#allocation4]]
        %v249 = vstv %s248
        %v250 = vadd.f32 %v247, %v249
        %v251 = vsub.f32 0.0, %v250
        %v252 = vmul.f32 %v251, 1.442695
        %v253 = vpow.pop %v252
        %v254 = vadd.f32 %v253, 1.0
        %v255 = vrcp.pop %v254
        %256 = vst [vmem:[%s228] sm:$0x3] %v255
        %s257 = sld [smem:[#allocation2 + $0x80]]
        %v258 = vstv %s257
        %v259 = vmul.f32 %v229, %v258
        %s260 = sld [smem:[#allocation2 + $0x81]]
        %v261 = vstv %s260
        %v262 = vmul.f32 %v230, %v261
        %v263 = vadd.f32 %v259, %v262
        %s264 = sld [smem:[#allocation2 + $0x82]]
        %v265 = vstv %s264
        %v266 = vmul.f32 %v231, %v265
        %v267 = vadd.f32 %v263, %v266
        %s268 = sld [smem:[#allocation2 + $0x83]]
        %v269 = vstv %s268
        %v270 = vmul.f32 %v232, %v269
        %v271 = vadd.f32 %v267, %v270
        %s272 = sld [smem:[#allocation4 + $0x1]]
        %v273 = vstv %s272
        %v274 = vadd.f32 %v271, %v273
        %v275 = vsub.f32 0.0, %v274
        %v276 = vmul.f32 %v275, 1.442695
        %v277 = vpow.pop %v276
        %v278 = vadd.f32 %v277, 1.0
        %v279 = vrcp.pop %v278
        %s280 = scalar_lea.vmem %s228, 2
        %281 = vst [vmem:[%s280] sm:$0x3] %v279
        %s282 = sld [smem:[#allocation2 + $0x100]]
        %v283 = vstv %s282
        %v284 = vmul.f32 %v229, %v283
        %s285 = sld [smem:[#allocation2 + $0x101]]
        %v286 = vstv %s285
        %v287 = vmul.f32 %v230, %v286
        %v288 = vadd.f32 %v284, %v287
        %s289 = sld [smem:[#allocation2 + $0x102]]
        %v290 = vstv %s289
        %v291 = vmul.f32 %v231, %v290
        %v292 = vadd.f32 %v288, %v291
        %s293 = sld [smem:[#allocation2 + $0x103]]
        %v294 = vstv %s293
        %v295 = vmul.f32 %v232, %v294
        %v296 = vadd.f32 %v292, %v295
        %s297 = sld [smem:[#allocation4 + $0x2]]
        %v298 = vstv %s297
        %v299 = vadd.f32 %v296, %v298
        %v300 = vsub.f32 0.0, %v299
        %v301 = vmul.f32 %v300, 1.442695
        %v302 = vpow.pop %v301
        %v303 = vadd.f32 %v302, 1.0
        %v304 = vrcp.pop %v303
        %s305 = scalar_lea.vmem %s228, 4
        %306 = vst [vmem:[%s305] sm:$0x3] %v304
        %p307 = scmp.lt.s32.totalorder %s20, 1
        %s308 = scalar_select %p307, %s20, 1
        %p309 = scmp.lt.s32.totalorder %s21, 0
        %s310 = scalar_select %p309, %s21, 0
        %s311 = smul.addr %s308, 3
        %s312 = sadd.s32 %s310, %s311
        %s313 = smul.addr %s312, 2
        %s314 = scalar_lea.vmem %s3, %s313
        // Predicated region
        $region41: #{deeplabv3_v1_forward.1} parent=31 // pred_check
          %p315 = pneg %p118
        $region42: #{deeplabv3_v1_forward.1} parent=31 // pred_check_branch
          %317 = sbr.rel (%p315) target = $region44
        $region43: #{deeplabv3_v1_forward.1} parent=31 // pred_region
          _
        $region44: #{deeplabv3_v1_forward.1} parent=31 // pred_fallthru
          _
      $region32: #{deeplabv3_v1_forward.1} parent=5 // pred_fallthru
        _
      %p318 = scmp.le.s32.totalorder 2, %s11
      // Predicated region
      $region45: #{deeplabv3_v1_forward.1} parent=5 // pred_check
        %p319 = pneg %p318
      $region46: #{deeplabv3_v1_forward.1} parent=5 // pred_check_branch
        %321 = sbr.rel (%p319) target = $region48
      $region47: #{deeplabv3_v1_forward.1} parent=5 // pred_region
        %s322 = ssub.s32 %s11, 2
        // Predicated region
        $region49: #{deeplabv3_v1_forward.1} parent=47 // pred_check
          %p323 = pneg %p124
        $region50: #{deeplabv3_v1_forward.1} parent=47 // pred_check_branch
          %325 = sbr.rel (%p323) target = $region52
        $region51: #{deeplabv3_v1_forward.1} parent=47 // pred_region
          %p326 = scmp.lt.s32.totalorder %s22, 1
          %s327 = scalar_select %p326, %s22, 1
          %p328 = scmp.lt.s32.totalorder %s23, 0
          %s329 = scalar_select %p328, %s23, 0
          %s330 = smul.addr %s327, 3
          %s331 = sadd.s32 %s329, %s330
          %s332 = smul.addr %s331, 2
          %s333 = scalar_lea.vmem %s3, %s332
        $region52: #{deeplabv3_v1_forward.1} parent=47 // pred_fallthru
          _
      $region48: #{deeplabv3_v1_forward.1} parent=5 // pred_fallthru
        _
    $region6: #{deeplabv3_v1_forward.1} parent=1 // loop_footer
      %s15 = sadd.s32 1, %s11
    $region7: #{deeplabv3_v1_forward.1} parent=1 // loop_footer_branch
      %10 = sbr.rel target = $region3
    $region8: #{deeplabv3_v1_forward.1} parent=1 // loop_exit
      _
    %334 = vsyncpa [#allocation3], 1
    %s335 = scalar_lea.sflag [#allocation3], 1
    %336 = vsyncpa %s335, 1
    %337 = vsyncpa [#allocation5], 1

</llo_original>
